<compile_context>
chip_gen: v7x
topology: tpu7x:2x2x1
jax: 0.10.0
libtpu: 0.0.40
codegen_flags: <defaults>
</compile_context>

<pallas_src>
import functools

import jax
import jax.numpy as jnp
from jax.experimental import pallas as pl
from jax.experimental.pallas import tpu as pltpu


# ---------------------------------------------------------------------------
# Fused path: one (tn, D) row-block per grid step, whole row reduced in VMEM.
# ---------------------------------------------------------------------------
def _layernorm_fused_kernel(gamma_ref, beta_ref, x_ref, o_ref, *, eps):
    # gamma_ref / beta_ref: scalar-prefetch SMEM refs of shape (1,)
    # x_ref / o_ref: (tn, D) blocks in VMEM
    x = x_ref[...].astype(jnp.float32)                        # (tn, D)
    mean = jnp.mean(x, axis=-1, keepdims=True)                # (tn, 1)
    var = jnp.mean((x - mean) ** 2, axis=-1, keepdims=True)   # unbiased=False
    inv = jax.lax.rsqrt(var + eps)                            # (tn, 1)
    scale = inv * gamma_ref[0]                                # (tn, 1)
    shift = beta_ref[0] - mean * scale                        # (tn, 1)
    o_ref[...] = (x * scale + shift).astype(o_ref.dtype)      # 1 mul + 1 add / elem


# ---------------------------------------------------------------------------
# Chunked-D path, kernel 1: per-row sum / sum-of-squares over D chunks,
# finalized into per-row scale/shift (gamma/beta already folded in).
# ---------------------------------------------------------------------------
def _layernorm_stats_kernel(gamma_ref, beta_ref, x_ref, scale_ref, shift_ref,
                            sum_ref, sq_ref, *, eps, d_true, td, mask_cols):
    d = pl.program_id(1)

    @pl.when(d == 0)
    def _():
        sum_ref[...] = jnp.zeros_like(sum_ref)
        sq_ref[...] = jnp.zeros_like(sq_ref)

    x = x_ref[...].astype(jnp.float32)                        # (tn, td)
    if mask_cols:
        # Last D chunk is ragged: zero out the pad columns before reducing.
        col = jax.lax.broadcasted_iota(jnp.int32, x.shape, 1) + d * td
        x = jnp.where(col < d_true, x, 0.0)
    sum_ref[...] += jnp.sum(x, axis=-1, keepdims=True)
    sq_ref[...] += jnp.sum(x * x, axis=-1, keepdims=True)

    @pl.when(d == pl.num_programs(1) - 1)
    def _():
        inv_d = 1.0 / d_true
        mean = sum_ref[...] * inv_d
        # Single-pass variance (f32 accumulation); clamp tiny negative values.
        var = jnp.maximum(sq_ref[...] * inv_d - mean * mean, 0.0)
        scale = jax.lax.rsqrt(var + eps) * gamma_ref[0]
        scale_ref[...] = scale
        shift_ref[...] = beta_ref[0] - mean * scale


# ---------------------------------------------------------------------------
# Chunked-D path, kernel 2: elementwise apply of per-row scale/shift.
# ---------------------------------------------------------------------------
def _layernorm_apply_kernel(x_ref, scale_ref, shift_ref, o_ref):
    x = x_ref[...].astype(jnp.float32)
    o_ref[...] = (x * scale_ref[...] + shift_ref[...]).astype(o_ref.dtype)


def _vmem_budget():
    """Generation-aware scoped-VMEM limit and usable per-block budget."""
    try:
        vmem_cap = getattr(pltpu.get_tpu_info(), "vmem_capacity_bytes", 64 << 20)
    except Exception:
        vmem_cap = 64 << 20                      # assume worst case (v7x)
    if vmem_cap >= (128 << 20):                  # v5e / v6e: 128 MiB physical
        vmem_limit = 64 << 20
    else:                                        # v7x: 64 MiB physical
        vmem_limit = 40 << 20
    usable = (vmem_limit * 3) // 4               # headroom for temps / scratch
    return vmem_limit, usable


def layer_norm(x, gamma, beta, eps=1e-05, *, force_chunked=False):
    """x: (N, C, L); gamma, beta: shape (1,) scalar params (as in the module)."""
    N, C, L = x.shape
    D = C * L
    x2 = x.reshape(N, D)                         # normalized axis -> lane axis

    itemsize = jnp.dtype(x.dtype).itemsize
    sub = {4: 8, 2: 16, 1: 32}.get(itemsize, 8)  # sublane pack per dtype
    vmem_limit, usable = _vmem_budget()

    # Per-element in-flight cost: double-buffered in + out in x.dtype plus
    # ~2 f32 temporaries for the upcast / centered values.
    bytes_per_elem = 4 * itemsize + 8
    target_block_bytes = 6 << 20                 # 4-8 MiB sweet spot

    fused_fits = (not force_chunked) and (bytes_per_elem * sub * D <= usable)

    if fused_fits:
        # -------- fused single-kernel path --------
        rows_budget = max(1, usable // (bytes_per_elem * D))
        rows_target = max(1, target_block_bytes // (D * itemsize))
        tn = min(N, rows_target, rows_budget)
        if N > sub:
            # Sublane-aligned and capped near N/2 so the parallel axis has
            # >= 2 steps (both v7x TensorCores get work).
            half = ((N + 1) // 2 + sub - 1) // sub * sub
            tn = min(tn, half)
            tn = max(sub, (tn // sub) * sub)
            if tn >= N:
                tn = N
        else:
            tn = N
        grid = (pl.cdiv(N, tn),)

        out = pl.pallas_call(
            functools.partial(_layernorm_fused_kernel, eps=eps),
            out_shape=jax.ShapeDtypeStruct((N, D), x.dtype),
            grid_spec=pltpu.PrefetchScalarGridSpec(
                num_scalar_prefetch=2,           # gamma, beta land in SMEM
                grid=grid,
                in_specs=[pl.BlockSpec((tn, D), lambda n, g, b: (n, 0))],
                out_specs=pl.BlockSpec((tn, D), lambda n, g, b: (n, 0)),
            ),
            compiler_params=pltpu.CompilerParams(
                dimension_semantics=("parallel",),
                vmem_limit_bytes=vmem_limit,
            ),
            cost_estimate=pl.CostEstimate(
                flops=8 * N * D,
                transcendentals=N,
                bytes_accessed=2 * N * D * itemsize),
        )(gamma, beta, x2)
        return out.reshape(N, C, L)

    # -------- chunked-D streaming path (stats kernel + apply kernel) --------
    tn = min(N, 8 * sub)
    if tn < N:
        tn = max(sub, (tn // sub) * sub)
    td_budget = max(128, usable // (bytes_per_elem * tn))
    td_target = max(128, target_block_bytes // (tn * itemsize))
    td = min(D, td_budget, td_target)
    td = max(128, (td // 128) * 128)             # lane-dense chunk width
    td = min(td, D)
    num_n = pl.cdiv(N, tn)
    num_d = pl.cdiv(D, td)
    mask_cols = (D % td) != 0

    scale, shift = pl.pallas_call(
        functools.partial(_layernorm_stats_kernel, eps=eps, d_true=D, td=td,
                          mask_cols=mask_cols),
        out_shape=(jax.ShapeDtypeStruct((N, 1), jnp.float32),
                   jax.ShapeDtypeStruct((N, 1), jnp.float32)),
        grid_spec=pltpu.PrefetchScalarGridSpec(
            num_scalar_prefetch=2,
            grid=(num_n, num_d),                 # reduction axis (D) last
            in_specs=[pl.BlockSpec((tn, td), lambda n, d, g, b: (n, d))],
            out_specs=(pl.BlockSpec((tn, 1), lambda n, d, g, b: (n, 0)),
                       pl.BlockSpec((tn, 1), lambda n, d, g, b: (n, 0))),
            scratch_shapes=[pltpu.VMEM((tn, 1), jnp.float32),
                            pltpu.VMEM((tn, 1), jnp.float32)],
        ),
        compiler_params=pltpu.CompilerParams(
            dimension_semantics=("parallel", "arbitrary"),
            vmem_limit_bytes=vmem_limit,
        ),
        cost_estimate=pl.CostEstimate(
            flops=3 * N * D,
            transcendentals=N,
            bytes_accessed=N * D * itemsize + 8 * N),
    )(gamma, beta, x2)

    out = pl.pallas_call(
        _layernorm_apply_kernel,
        out_shape=jax.ShapeDtypeStruct((N, D), x.dtype),
        grid_spec=pltpu.PrefetchScalarGridSpec(
            num_scalar_prefetch=0,
            grid=(num_n, num_d),
            in_specs=[pl.BlockSpec((tn, td), lambda n, d: (n, d)),
                      pl.BlockSpec((tn, 1), lambda n, d: (n, 0)),
                      pl.BlockSpec((tn, 1), lambda n, d: (n, 0))],
            out_specs=pl.BlockSpec((tn, td), lambda n, d: (n, d)),
        ),
        compiler_params=pltpu.CompilerParams(
            dimension_semantics=("parallel", "parallel"),
            vmem_limit_bytes=vmem_limit,
        ),
        cost_estimate=pl.CostEstimate(
            flops=2 * N * D,
            transcendentals=0,
            bytes_accessed=2 * N * D * itemsize + 8 * N),
    )(x2, scale, shift)
    return out.reshape(N, C, L)


if __name__ == "__main__":
    eps = 1e-05
    # Deterministic parameter init, matching the module's __init__:
    # gamma = ones(1), beta = zeros(1)
    gamma = jnp.ones((1,), dtype=jnp.float32)
    beta = jnp.zeros((1,), dtype=jnp.float32)

    def ref_ln(x):
        mean = jnp.mean(x, axis=(1, 2), keepdims=True)
        var = jnp.mean((x - mean) ** 2, axis=(1, 2), keepdims=True)
        return (x - mean) / jnp.sqrt(var + eps) * gamma[0] + beta[0]

    # 1) Module-sized input (fused path, single block).
    x1 = jax.random.normal(jax.random.PRNGKey(0), (2, 4, 16), dtype=jnp.float32)
    o1 = jax.block_until_ready(layer_norm(x1, gamma, beta, eps))
    assert jnp.allclose(o1, ref_ln(x1), atol=2e-5, rtol=2e-5), "fused mismatch"

    # 2) Fused path with a ragged last row-block (N not a multiple of tn).
    x2 = jax.random.normal(jax.random.PRNGKey(1), (10, 4, 16), dtype=jnp.float32)
    o2 = jax.block_until_ready(layer_norm(x2, gamma, beta, eps))
    assert jnp.allclose(o2, ref_ln(x2), atol=2e-5, rtol=2e-5), "ragged-N mismatch"

    # 3) Chunked-D path (forced at a small shape; exercises the ragged last
    #    D chunk + column masking without needing a huge tensor).
    x3 = jax.random.normal(jax.random.PRNGKey(2), (4, 3, 100), dtype=jnp.float32)
    o3 = jax.block_until_ready(layer_norm(x3, gamma, beta, eps, force_chunked=True))
    assert jnp.allclose(o3, ref_ln(x3), atol=2e-5, rtol=2e-5), "chunked mismatch"

    print("KERNEL_OK")
</pallas_src>

<mosaic_0001>
module attributes {stable_mosaic.version = 11 : i64} {
  func.func @_layernorm_fused_kernel(%arg0: i32, %arg1: memref<1xf32, #tpu.memory_space<smem>>, %arg2: memref<1xf32, #tpu.memory_space<smem>>, %arg3: memref<2x64xf32, #tpu.memory_space<vmem>>, %arg4: memref<2x64xf32, #tpu.memory_space<vmem>>) attributes {dimension_semantics = [#tpu.dimension_semantics<parallel>], iteration_bounds = array<i64: 1>, scalar_prefetch = 2 : i64, scratch_operands = 0 : i64, tpu.core_type = #tpu.core_type<tc>, window_params = [{transform_indices = @transform_0, window_bounds = array<i64: 2, 64>}, {transform_indices = @transform_1, window_bounds = array<i64: 2, 64>}]} {
    %c0 = arith.constant 0 : index
    %c0_0 = arith.constant 0 : index
    %0 = vector.load %arg3[%c0, %c0_0] : memref<2x64xf32, #tpu.memory_space<vmem>>, vector<2x64xf32>
    %cst = arith.constant dense<0.000000e+00> : vector<2xf32>
    %1 = vector.multi_reduction <add>, %0, %cst [1] : vector<2x64xf32> to vector<2xf32>
    %2 = vector.shape_cast %1 : vector<2xf32> to vector<2x1xf32>
    %cst_1 = arith.constant 6.400000e+01 : f32
    %3 = vector.broadcast %cst_1 : f32 to vector<2x1xf32>
    %4 = arith.divf %2, %3 : vector<2x1xf32>
    %5 = vector.broadcast %4 : vector<2x1xf32> to vector<2x64xf32>
    %6 = arith.subf %0, %5 : vector<2x64xf32>
    %7 = arith.mulf %6, %6 : vector<2x64xf32>
    %cst_2 = arith.constant dense<0.000000e+00> : vector<2xf32>
    %8 = vector.multi_reduction <add>, %7, %cst_2 [1] : vector<2x64xf32> to vector<2xf32>
    %9 = vector.shape_cast %8 : vector<2xf32> to vector<2x1xf32>
    %cst_3 = arith.constant 6.400000e+01 : f32
    %10 = vector.broadcast %cst_3 : f32 to vector<2x1xf32>
    %11 = arith.divf %9, %10 : vector<2x1xf32>
    %cst_4 = arith.constant 9.99999974E-6 : f32
    %12 = vector.broadcast %cst_4 : f32 to vector<2x1xf32>
    %13 = arith.addf %11, %12 : vector<2x1xf32>
    %14 = math.rsqrt %13 : vector<2x1xf32>
    %c0_5 = arith.constant 0 : index
    %15 = memref.load %arg1[%c0_5] : memref<1xf32, #tpu.memory_space<smem>>
    %16 = vector.broadcast %15 : f32 to vector<2x1xf32>
    %17 = arith.mulf %14, %16 : vector<2x1xf32>
    %c0_6 = arith.constant 0 : index
    %18 = memref.load %arg2[%c0_6] : memref<1xf32, #tpu.memory_space<smem>>
    %19 = arith.mulf %4, %17 : vector<2x1xf32>
    %20 = vector.broadcast %18 : f32 to vector<2x1xf32>
    %21 = arith.subf %20, %19 : vector<2x1xf32>
    %22 = vector.broadcast %17 : vector<2x1xf32> to vector<2x64xf32>
    %23 = arith.mulf %0, %22 : vector<2x64xf32>
    %24 = vector.broadcast %21 : vector<2x1xf32> to vector<2x64xf32>
    %25 = arith.addf %23, %24 : vector<2x64xf32>
    %c0_7 = arith.constant 0 : index
    %c0_8 = arith.constant 0 : index
    %26 = vector.load %arg4[%c0_7, %c0_8] : memref<2x64xf32, #tpu.memory_space<vmem>>, vector<2x64xf32>
    tpu.vector_store %arg4[%c0_7, %c0_8], %25 {strides = array<i32>} : memref<2x64xf32, #tpu.memory_space<vmem>>, vector<2x64xf32>,
    return
  }
  func.func @transform_0(%arg0: i32, %arg1: memref<1xf32, #tpu.memory_space<smem>>, %arg2: memref<1xf32, #tpu.memory_space<smem>>) -> (i32, i32) {
    %c0_i32 = arith.constant 0 : i32
    %c0_i32_0 = arith.constant 0 : i32
    return %arg0, %c0_i32 : i32, i32
  }
  func.func @transform_1(%arg0: i32, %arg1: memref<1xf32, #tpu.memory_space<smem>>, %arg2: memref<1xf32, #tpu.memory_space<smem>>) -> (i32, i32) {
    %c0_i32 = arith.constant 0 : i32
    %c0_i32_0 = arith.constant 0 : i32
    return %arg0, %c0_i32 : i32, i32
  }
}

</mosaic_0001>

<llo_original>
// kernel: tpu_custom_call.1
$region0: #{tpu_custom_call.1}
  #allocation0 [shape = 'u32[]', space=smem, size = 0x4, offset = 0x4, fixed_abs, tag = 'smem constant byte address 0x4 - core index']
  #allocation1 [shape = 'u32[144,128]{1,0:T(1,128)}', space=vmem, size = 0x12000, scoped, tag = 'internal scratch']
  #allocation2 [shape = 's32[1]{0}', space=sflag, size = 0x4, scoped, tag = 'scoped memory for tpu_custom_call.1']
  #allocation3 [shape = 'f32[1]{0:T(128)S(6)}', space=smem, size = 0x200, scoped, tag = 'prefetched SMEM operand 0']
  #allocation4 [shape = 'f32[1]{0:T(128)S(6)}', space=smem, size = 0x200, scoped, tag = 'prefetched SMEM operand 1']
  %s0 = inlined_call_operand.<no memory space> [shape: f32[1], index: 0, kind: input, shape index: {}]
  %s1 = inlined_call_operand.<no memory space> [shape: f32[1], index: 1, kind: input, shape index: {}]
  %s2 = inlined_call_operand.vmem [shape: f32[2,64], index: 2, kind: input, shape index: {}]
  %s3 = inlined_call_operand.hbm [shape: f32[2,64], index: 3, kind: output, shape index: {}]
  %s4 = sld [smem:[#allocation0]]
  $region14: #{tpu_custom_call.1} parent=0
    _
  %s6 = ssub.s32 1, %s4
  %s7 = scalar_select 0, %s6, %s4
  %8 = sst [smem:[#allocation3]] %s0
  %9 = sst [smem:[#allocation4]] %s1
  $region1: #{tpu_custom_call.1} parent=0
    #allocation5 [shape = 'u8[1024]{0}', space=vmem, size = 0x400, scoped, tag = 'output window, operand 0, single buffered']
    #allocation6 [shape = 's32[1]{0}', space=sflag, size = 0x4, scoped, tag = 'scoped memory for tpu_custom_call.1']
    %10 = vsyncpa [#allocation6], 0
    // Predicated region
    $region2: #{tpu_custom_call.1} parent=1 // pred_check
      _
    $region3: #{tpu_custom_call.1} parent=1 // pred_check_branch
      %12 = sbr.rel (0) target = $region5
    $region4: #{tpu_custom_call.1} parent=1 // pred_region
      _
    $region5: #{tpu_custom_call.1} parent=1 // pred_fallthru
      _
    %v13 = vld [vmem:[%s2] sm:$0x3]
    %vm14 = vcmask 517120
    %v15 = vsel %vm14, %v13, 0.0
    %16 = vadd.xlane.f32.xlu0 %v15
    %v17 = vpop.xlane.xlu0 %16
    %v18 = vrcp.pop 64.0
    %v19 = vmul.f32 %v17, %v18
    %v20 = vsub.f32 %v13, %v19
    %v21 = vmul.f32 %v20, %v20
    %v22 = vsel %vm14, %v21, 0.0
    %23 = vadd.xlane.f32.xlu0 %v22
    %v24 = vpop.xlane.xlu0 %23
    %v25 = vmul.f32 %v24, %v18
    %v26 = vadd.f32 %v25, 1e-05
    %v27 = vrsqrt.pop %v26
    %s28 = sld [smem:[#allocation3]]
    %v29 = vstv %s28
    %v30 = vmul.f32 %v27, %v29
    %s31 = sld [smem:[#allocation4]]
    %v32 = vmul.f32 %v19, %v30
    %v33 = vstv %s31
    %v34 = vsub.f32 %v33, %v32
    %v35 = vmul.f32 %v13, %v30
    %v36 = vadd.f32 %v35, %v34
    %37 = vst.msk [vmem:[#allocation5] sm:$0x3] %vm14, %v36
    // Predicated region
    $region6: #{tpu_custom_call.1} parent=1 // pred_check
      _
    $region7: #{tpu_custom_call.1} parent=1 // pred_check_branch
      %39 = sbr.rel (0) target = $region9
    $region8: #{tpu_custom_call.1} parent=1 // pred_region
      %s41 = ssub.s32 32, 32
      %42 = vsyncadd [#allocation6], %s41
      %s44 = sshll.u32 [#allocation5], 4
      %s45 = int_to_ptr.vmem [resolvable:$true] %s44
      %47 = dma.vmem_to_hbm [thread:$0]  %s45, 32, %s3, [#allocation6]
    $region9: #{tpu_custom_call.1} parent=1 // pred_fallthru
      _
    // Predicated region
    $region10: #{tpu_custom_call.1} parent=1 // pred_check
      _
    $region11: #{tpu_custom_call.1} parent=1 // pred_check_branch
      %49 = sbr.rel (0) target = $region13
    $region12: #{tpu_custom_call.1} parent=1 // pred_region
      %50 = dma.done [#allocation6], 32
    $region13: #{tpu_custom_call.1} parent=1 // pred_fallthru
      _
    %51 = vsyncpa [#allocation6], 1

</llo_original>
